<compile_context>
chip_gen: v5e
topology: v5e:2x2
jax: 0.10.0
libtpu: 0.0.40
codegen_flags: <defaults>
</compile_context>

<pallas_src>
import jax
import jax.numpy as jnp
from jax.experimental import pallas as pl
from jax.experimental.pallas import tpu as pltpu


# --------------------------------------------------------------------------------------
# Kernels
# --------------------------------------------------------------------------------------
def _imlinear_kernel(x_ref, w_ref, b_ref, o_ref):
    # x_ref: (Bt, C_in, TN)  channels x spatial-lanes for Bt batch elements
    # w_ref: (C_out, C_in)   PyTorch Linear weight, used directly (no transpose)
    # b_ref: (C_out, 1)
    # o_ref: (Bt, C_out, TN)
    w = w_ref[...]
    bias = b_ref[...].astype(jnp.float32)
    for b in range(x_ref.shape[0]):  # Bt is a small static constant
        acc = jnp.dot(w, x_ref[b], preferred_element_type=jnp.float32)
        o_ref[b] = (acc + bias).astype(o_ref.dtype)


def _imlinear_kernel_ktiled(x_ref, w_ref, b_ref, o_ref, acc_ref):
    # Same as above but C_in is tiled along the last ("arbitrary") grid axis and the
    # partial products accumulate in an f32 VMEM scratch.
    # x_ref: (Bt, TK, TN); w_ref: (C_out, TK); b_ref: (C_out, 1)
    # o_ref/acc_ref: (Bt, C_out, TN)
    k = pl.program_id(2)

    @pl.when(k == 0)
    def _():
        acc_ref[...] = jnp.zeros_like(acc_ref)

    w = w_ref[...]
    for b in range(x_ref.shape[0]):
        acc_ref[b] += jnp.dot(w, x_ref[b], preferred_element_type=jnp.float32)

    @pl.when(k == pl.num_programs(2) - 1)
    def _():
        bias = b_ref[...].astype(jnp.float32)
        for b in range(x_ref.shape[0]):
            o_ref[b] = (acc_ref[b] + bias).astype(o_ref.dtype)


# --------------------------------------------------------------------------------------
# VMEM / tiling model
# --------------------------------------------------------------------------------------
def _round_up(x, m):
    return (x + m - 1) // m * m


def _vmem_limit_bytes():
    """Scoped-VMEM limit: physical per-core VMEM minus ~25% headroom, capped at 96 MiB.
    v7x (64 MiB) -> 48 MiB; v5e/v6e (128 MiB) -> 96 MiB."""
    cap = 64 * 1024 * 1024  # conservative default = v7x per-TC VMEM
    try:
        info = pltpu.get_tpu_info()
        cap = int(getattr(info, "vmem_capacity_bytes", cap)) or cap
    except Exception:
        pass
    return min(cap * 3 // 4, 96 * 1024 * 1024)


def _plan_tiles(B, c_in, c_out, hw, dtype, budget, tn_req=2048):
    """Choose (Bt batch-block, TN spatial tile, TK channel tile) against `budget` bytes,
    accounting for sublane (8/16/32 rows) and lane (128) padding of VMEM tiles."""
    itemsize = jnp.dtype(dtype).itemsize
    sub = max(8, 32 // itemsize)  # sublane rows per vreg tile: 8 f32 / 16 bf16 / 32 int8
    c_out_p = _round_up(c_out, sub)

    # --- K (C_in) tiling: keep the (double-buffered, padded) weight slab <= ~budget/4
    #     so the spatial tile -- the real perf lever -- stays large.
    tk = c_in
    if 2 * c_out_p * _round_up(c_in, 128) * itemsize > budget // 4:
        for cand in (2048, 1024, 512, 256, 128):
            if cand < c_in and c_in % cand == 0:
                tk = cand
                if 2 * c_out_p * cand * itemsize <= budget // 4:
                    break
        # TODO(synk): if C_in has no multiple-of-128 divisor the full weight stays
        # resident; an N (C_out) tiled fallback would be needed for that case.
    k_tiled = tk < c_in
    tk_p = _round_up(tk, sub)

    # Resident (double-buffered) weight + bias footprint, padded to vreg tiles.
    resident = 2 * c_out_p * (_round_up(tk, 128) + 128) * itemsize

    # Per-(lane, batch-element) bytes of the streamed buffers:
    #   double-buffered x tile + double-buffered out tile + f32 accumulator (K-tiled).
    per_lane = 2 * (tk_p + c_out_p) * itemsize
    if k_tiled:
        per_lane += _round_up(c_out, 8) * 4

    # --- batch blocking for small feature maps (amortize per-grid-step overhead)
    bt = min(B, max(1, tn_req // max(hw, 1))) if hw < 512 else 1

    avail = max(budget - resident, per_lane * 128)
    lanes = max(128, avail // (per_lane * bt))
    while bt > 1 and lanes < hw:  # shrink batch blocking before the spatial tile
        bt -= 1
        lanes = max(128, avail // (per_lane * bt))

    # --- spatial tile: full extent if it fits, else the largest multiple of 128
    if hw <= min(lanes, tn_req):
        tn = hw  # full extent: always a legal block shape
    else:
        tn = max(128, (min(lanes, tn_req) // 128) * 128)
    return bt, tn, tk


# --------------------------------------------------------------------------------------
# Wrapper
# --------------------------------------------------------------------------------------
def im_linear(x_nchw, weight, bias=None, *, tn_req=2048):
    """x_nchw: (B, C_in, H, W); weight: (C_out, C_in) (PyTorch Linear layout);
    bias: (C_out,) or None.  Returns (B, C_out, H, W)."""
    B, C_in, H, W = x_nchw.shape
    C_out = weight.shape[0]
    hw = H * W
    dtype = x_nchw.dtype
    itemsize = jnp.dtype(dtype).itemsize

    x3 = x_nchw.reshape(B, C_in, hw)  # free reshape (no copy), spatial axis on lanes
    if bias is None:
        bias = jnp.zeros((C_out,), weight.dtype)
    b2 = bias.reshape(C_out, 1)

    vmem_limit = _vmem_limit_bytes()
    budget = int(vmem_limit * 0.9)          # picker spends what the compiler may use
    bt, tn, tk = _plan_tiles(B, C_in, C_out, hw, dtype, budget, tn_req)

    nb = pl.cdiv(B, bt)
    nj = pl.cdiv(hw, tn)
    # TODO(synk): on v7x, if nb*nj is 1 or odd the second TensorCore can sit idle;
    # splitting the spatial axis further would rebalance at the cost of shorter DMA rows.

    cost = pl.CostEstimate(
        flops=2 * B * hw * C_in * C_out,
        bytes_accessed=(C_in + C_out) * B * hw * itemsize + C_out * C_in * itemsize,
        transcendentals=0,
    )

    if tk == C_in:
        # Weight + bias stay fully resident in VMEM (constant index_map).
        grid_spec = pltpu.PrefetchScalarGridSpec(
            num_scalar_prefetch=0,
            grid=(nb, nj),
            in_specs=[
                pl.BlockSpec((bt, C_in, tn), lambda b, j: (b, 0, j)),
                pl.BlockSpec((C_out, C_in), lambda b, j: (0, 0)),
                pl.BlockSpec((C_out, 1), lambda b, j: (0, 0)),
            ],
            out_specs=pl.BlockSpec((bt, C_out, tn), lambda b, j: (b, 0, j)),
        )
        kernel = _imlinear_kernel
        semantics = ("parallel", "parallel")
    else:
        # Large weight: tile C_in on an "arbitrary" reduction axis, accumulate in f32.
        nk = C_in // tk
        grid_spec = pltpu.PrefetchScalarGridSpec(
            num_scalar_prefetch=0,
            grid=(nb, nj, nk),
            in_specs=[
                pl.BlockSpec((bt, tk, tn), lambda b, j, k: (b, k, j)),
                pl.BlockSpec((C_out, tk), lambda b, j, k: (0, k)),
                pl.BlockSpec((C_out, 1), lambda b, j, k: (0, 0)),
            ],
            out_specs=pl.BlockSpec((bt, C_out, tn), lambda b, j, k: (b, 0, j)),
            scratch_shapes=[pltpu.VMEM((bt, C_out, tn), jnp.float32)],
        )
        kernel = _imlinear_kernel_ktiled
        semantics = ("parallel", "parallel", "arbitrary")

    out3 = pl.pallas_call(
        kernel,
        out_shape=jax.ShapeDtypeStruct((B, C_out, hw), dtype),
        grid_spec=grid_spec,
        compiler_params=pltpu.CompilerParams(
            dimension_semantics=semantics,
            vmem_limit_bytes=vmem_limit,
        ),
        cost_estimate=cost,
    )(x3, weight, b2)

    return out3.reshape(B, C_out, H, W)


# --------------------------------------------------------------------------------------
# Self-test
# --------------------------------------------------------------------------------------
if __name__ == "__main__":
    key = jax.random.PRNGKey(0)
    k_x, k_w, k_b = jax.random.split(key, 3)

    B, C_in, H, W = 2, 4, 16, 16
    C_out = 8

    x = jax.random.normal(k_x, (B, C_in, H, W), dtype=jnp.float32)
    # Deterministic parameter init (mimics nn.Linear uniform bound 1/sqrt(in))
    bound = 1.0 / jnp.sqrt(jnp.float32(C_in))
    weight = jax.random.uniform(k_w, (C_out, C_in), jnp.float32, -bound, bound)
    bias = jax.random.uniform(k_b, (C_out,), jnp.float32, -bound, bound)

    out = im_linear(x, weight, bias)
    jax.block_until_ready(out)

    # Pure-JAX reference of permute -> linear -> permute semantics.
    ref = jnp.einsum("bchw,oc->bohw", x, weight) + bias[None, :, None, None]
    assert out.shape == (B, C_out, H, W)
    assert jnp.allclose(out, ref, atol=1e-4, rtol=1e-4)

    print("KERNEL_OK")
</pallas_src>

<mosaic_0001>
module attributes {stable_mosaic.version = 11 : i64} {
  func.func @_imlinear_kernel(%arg0: i32, %arg1: i32, %arg2: memref<2x4x256xf32, #tpu.memory_space<vmem>>, %arg3: memref<8x4xf32, #tpu.memory_space<vmem>>, %arg4: memref<8x1xf32, #tpu.memory_space<vmem>>, %arg5: memref<2x8x256xf32, #tpu.memory_space<vmem>>) attributes {dimension_semantics = [#tpu.dimension_semantics<parallel>, #tpu.dimension_semantics<parallel>], iteration_bounds = array<i64: 1, 1>, scalar_prefetch = 0 : i64, scratch_operands = 0 : i64, tpu.core_type = #tpu.core_type<tc>, window_params = [{transform_indices = @transform_0, window_bounds = array<i64: 2, 4, 256>}, {pipeline_mode = #tpu.pipeline_mode<synchronous>, transform_indices = @transform_1, window_bounds = array<i64: 8, 4>}, {pipeline_mode = #tpu.pipeline_mode<synchronous>, transform_indices = @transform_2, window_bounds = array<i64: 8, 1>}, {transform_indices = @transform_3, window_bounds = array<i64: 2, 8, 256>}]} {
    %c0 = arith.constant 0 : index
    %c0_0 = arith.constant 0 : index
    %0 = vector.load %arg3[%c0, %c0_0] : memref<8x4xf32, #tpu.memory_space<vmem>>, vector<8x4xf32>
    %c0_1 = arith.constant 0 : index
    %c0_2 = arith.constant 0 : index
    %1 = vector.load %arg4[%c0_1, %c0_2] : memref<8x1xf32, #tpu.memory_space<vmem>>, vector<8x1xf32>
    %c0_3 = arith.constant 0 : index
    %c0_4 = arith.constant 0 : index
    %c0_5 = arith.constant 0 : index
    %2 = vector.load %arg2[%c0_3, %c0_4, %c0_5] : memref<2x4x256xf32, #tpu.memory_space<vmem>>, vector<1x4x256xf32>
    %3 = vector.shape_cast %2 : vector<1x4x256xf32> to vector<4x256xf32>
    %cst = arith.constant dense<0.000000e+00> : vector<8x256xf32>
    %4 = tpu.matmul %0, %3, %cst {dimension_numbers = #tpu.dot_dimension_numbers<[1], [0], [0], [1], [0, 0, 1, 1], [], []>} : vector<8x4xf32>, vector<4x256xf32>, vector<8x256xf32> -> vector<8x256xf32>
    %5 = vector.broadcast %1 : vector<8x1xf32> to vector<8x256xf32>
    %6 = arith.addf %4, %5 : vector<8x256xf32>
    %c0_6 = arith.constant 0 : index
    %c0_7 = arith.constant 0 : index
    %c0_8 = arith.constant 0 : index
    %7 = vector.load %arg5[%c0_6, %c0_7, %c0_8] : memref<2x8x256xf32, #tpu.memory_space<vmem>>, vector<1x8x256xf32>
    %8 = vector.shape_cast %7 : vector<1x8x256xf32> to vector<8x256xf32>
    %9 = vector.shape_cast %6 : vector<8x256xf32> to vector<1x8x256xf32>
    tpu.vector_store %arg5[%c0_6, %c0_7, %c0_8], %9 {strides = array<i32>} : memref<2x8x256xf32, #tpu.memory_space<vmem>>, vector<1x8x256xf32>,
    %c1 = arith.constant 1 : index
    %c0_9 = arith.constant 0 : index
    %c0_10 = arith.constant 0 : index
    %10 = vector.load %arg2[%c1, %c0_9, %c0_10] : memref<2x4x256xf32, #tpu.memory_space<vmem>>, vector<1x4x256xf32>
    %11 = vector.shape_cast %10 : vector<1x4x256xf32> to vector<4x256xf32>
    %cst_11 = arith.constant dense<0.000000e+00> : vector<8x256xf32>
    %12 = tpu.matmul %0, %11, %cst_11 {dimension_numbers = #tpu.dot_dimension_numbers<[1], [0], [0], [1], [0, 0, 1, 1], [], []>} : vector<8x4xf32>, vector<4x256xf32>, vector<8x256xf32> -> vector<8x256xf32>
    %13 = vector.broadcast %1 : vector<8x1xf32> to vector<8x256xf32>
    %14 = arith.addf %12, %13 : vector<8x256xf32>
    %c1_12 = arith.constant 1 : index
    %c0_13 = arith.constant 0 : index
    %c0_14 = arith.constant 0 : index
    %15 = vector.load %arg5[%c1_12, %c0_13, %c0_14] : memref<2x8x256xf32, #tpu.memory_space<vmem>>, vector<1x8x256xf32>
    %16 = vector.shape_cast %15 : vector<1x8x256xf32> to vector<8x256xf32>
    %17 = vector.shape_cast %14 : vector<8x256xf32> to vector<1x8x256xf32>
    tpu.vector_store %arg5[%c1_12, %c0_13, %c0_14], %17 {strides = array<i32>} : memref<2x8x256xf32, #tpu.memory_space<vmem>>, vector<1x8x256xf32>,
    return
  }
  func.func @transform_0(%arg0: i32, %arg1: i32) -> (i32, i32, i32) {
    %c0_i32 = arith.constant 0 : i32
    %c0_i32_0 = arith.constant 0 : i32
    return %arg0, %c0_i32, %arg1 : i32, i32, i32
  }
  func.func @transform_1(%arg0: i32, %arg1: i32) -> (i32, i32) {
    %c0_i32 = arith.constant 0 : i32
    %c0_i32_0 = arith.constant 0 : i32
    %c0_i32_1 = arith.constant 0 : i32
    return %c0_i32, %c0_i32_0 : i32, i32
  }
  func.func @transform_2(%arg0: i32, %arg1: i32) -> (i32, i32) {
    %c0_i32 = arith.constant 0 : i32
    %c0_i32_0 = arith.constant 0 : i32
    %c0_i32_1 = arith.constant 0 : i32
    return %c0_i32, %c0_i32_0 : i32, i32
  }
  func.func @transform_3(%arg0: i32, %arg1: i32) -> (i32, i32, i32) {
    %c0_i32 = arith.constant 0 : i32
    %c0_i32_0 = arith.constant 0 : i32
    return %arg0, %c0_i32, %arg1 : i32, i32, i32
  }
}

</mosaic_0001>

<llo_original>
// kernel: tpu_custom_call.1
$region0: #{tpu_custom_call.1}
  #allocation0 [shape = 'u32[]', space=smem, size = 0x4, offset = 0x4, fixed_abs, tag = 'smem constant byte address 0x4 - core index']
  #allocation1 [shape = 'u32[72,128]{1,0:T(1,128)}', space=vmem, size = 0x9000, scoped, tag = 'internal scratch']
  %s0 = inlined_call_operand.vmem [shape: f32[2,4,256], index: 0, kind: input, shape index: {}]
  %s1 = inlined_call_operand.vmem [shape: f32[8,4], index: 1, kind: input, shape index: {}]
  %s2 = inlined_call_operand.vmem [shape: f32[8,1], index: 2, kind: input, shape index: {}]
  %s3 = inlined_call_operand.hbm [shape: f32[2,8,256], index: 3, kind: output, shape index: {}]
  %s4 = sld [smem:[#allocation0]]
  $region22: #{tpu_custom_call.1} parent=0
    _
  %s6 = ssub.s32 1, %s4
  %s7 = scalar_select 0, %s6, %s4
  $region1: #{tpu_custom_call.1} parent=0
    #allocation2 [shape = 'u8[16384]{0}', space=vmem, size = 0x4000, scoped, tag = 'output window, operand 0, single buffered']
    #allocation3 [shape = 's32[1]{0}', space=sflag, size = 0x4, scoped, tag = 'scoped memory for tpu_custom_call.1']
    %8 = vsyncpa [#allocation3], 0
    // Predicated region
    $region2: #{tpu_custom_call.1} parent=1 // pred_check
      _
    $region3: #{tpu_custom_call.1} parent=1 // pred_check_branch
      %10 = sbr.rel (0) target = $region5
    $region4: #{tpu_custom_call.1} parent=1 // pred_region
      _
    $region5: #{tpu_custom_call.1} parent=1 // pred_fallthru
      _
    // Predicated region
    $region6: #{tpu_custom_call.1} parent=1 // pred_check
      _
    $region7: #{tpu_custom_call.1} parent=1 // pred_check_branch
      %12 = sbr.rel (0) target = $region9
    $region8: #{tpu_custom_call.1} parent=1 // pred_region
      _
    $region9: #{tpu_custom_call.1} parent=1 // pred_fallthru
      _
    // Predicated region
    $region10: #{tpu_custom_call.1} parent=1 // pred_check
      _
    $region11: #{tpu_custom_call.1} parent=1 // pred_check_branch
      %14 = sbr.rel (0) target = $region13
    $region12: #{tpu_custom_call.1} parent=1 // pred_region
      _
    $region13: #{tpu_custom_call.1} parent=1 // pred_fallthru
      _
    %v15 = vld [vmem:[%s1] sm:$0xff]
    %v16 = vld [vmem:[%s2] sm:$0xff]
    %v17 = vld [vmem:[%s0] sm:$0xff]
    %19 = vset.pattern.permute.xlu0 0
    %20 = vperm.xlu0 %19, %v16
    %v21 = vpop.permute.xlu0 %20
    %24 = vst [vmem:[#allocation1] ss:$2 sm:$0xff] %v17
    %v25 = vld.sshfl [vmem:[#allocation1] sm:$0xff pattern:$0x75316420]
    %v26 = vld.sshfl [vmem:[#allocation1 + $0x8] sm:$0xff pattern:$0x75316420]
    %vm27 = vcmask 31744
    %v29 = vsel %vm27, %v15, 0
    %vm31 = vcmask 1043456
    %v32 = vsel %vm31, %v25, 0
    %v34 = vsel %vm31, %v26, 0
    %36 = vmatpush.msra.mxu0 0.0
    %37 = vmatpush.msra.mxu0 0.0
    %38 = vmatpush.msra.mxu0 0.0
    %39 = vmatpush.msra.mxu0 0.0
    %40 = vmatpush.msra.mxu0 0.0
    %41 = vmatpush.msra.mxu0 0.0
    %42 = vmatpush.msra.mxu0 0.0
    %43 = vmatpush.msra.mxu0 0.0
    %44 = vmatpush.msra.mxu0 0.0
    %45 = vmatpush.msra.mxu0 0.0
    %46 = vmatpush.msra.mxu0 0.0
    %47 = vmatpush.msra.mxu0 0.0
    %48 = vmatpush.msra.mxu0 0.0
    %49 = vmatpush.msra.mxu0 0.0
    %50 = vmatpush.msra.mxu0 0.0
    %51 = vmatpush.msra.mxu0 %v32
    %52 = vmatmul.f32.gmra.mxu0 %v29
    %v53 = vpop.f32.mrf.mxu0
    %v54 = vadd.f32 %v21, %v53
    %55 = vdwg.mxu0
    %56 = vmatpush.msra.mxu0 0.0
    %57 = vmatpush.msra.mxu0 0.0
    %58 = vmatpush.msra.mxu0 0.0
    %59 = vmatpush.msra.mxu0 0.0
    %60 = vmatpush.msra.mxu0 0.0
    %61 = vmatpush.msra.mxu0 0.0
    %62 = vmatpush.msra.mxu0 0.0
    %63 = vmatpush.msra.mxu0 0.0
    %64 = vmatpush.msra.mxu0 0.0
    %65 = vmatpush.msra.mxu0 0.0
    %66 = vmatpush.msra.mxu0 0.0
    %67 = vmatpush.msra.mxu0 0.0
    %68 = vmatpush.msra.mxu0 0.0
    %69 = vmatpush.msra.mxu0 0.0
    %70 = vmatpush.msra.mxu0 0.0
    %71 = vmatpush.msra.mxu0 %v34
    %72 = vmatmul.f32.gmra.mxu0 %v29
    %v73 = vpop.f32.mrf.mxu0
    %v74 = vadd.f32 %v21, %v73
    %75 = vdwg.mxu0
    %76 = vst [vmem:[#allocation2] sm:$0xff] %v54
    %77 = vst [vmem:[#allocation2 + $0x8] sm:$0xff] %v74
    %s78 = scalar_lea.vmem %s0, 8
    %v79 = vld [vmem:[%s78] sm:$0xff]
    %81 = vst [vmem:[#allocation1] ss:$2 sm:$0xff] %v79
    %v82 = vld.sshfl [vmem:[#allocation1] sm:$0xff pattern:$0x75316420]
    %v83 = vld.sshfl [vmem:[#allocation1 + $0x8] sm:$0xff pattern:$0x75316420]
    %v84 = vsel %vm31, %v82, 0
    %v86 = vsel %vm31, %v83, 0
    %88 = vmatpush.msra.mxu0 0.0
    %89 = vmatpush.msra.mxu0 0.0
    %90 = vmatpush.msra.mxu0 0.0
    %91 = vmatpush.msra.mxu0 0.0
    %92 = vmatpush.msra.mxu0 0.0
    %93 = vmatpush.msra.mxu0 0.0
    %94 = vmatpush.msra.mxu0 0.0
    %95 = vmatpush.msra.mxu0 0.0
    %96 = vmatpush.msra.mxu0 0.0
    %97 = vmatpush.msra.mxu0 0.0
    %98 = vmatpush.msra.mxu0 0.0
    %99 = vmatpush.msra.mxu0 0.0
    %100 = vmatpush.msra.mxu0 0.0
    %101 = vmatpush.msra.mxu0 0.0
    %102 = vmatpush.msra.mxu0 0.0
    %103 = vmatpush.msra.mxu0 %v84
    %104 = vmatmul.f32.gmra.mxu0 %v29
    %v105 = vpop.f32.mrf.mxu0
    %v106 = vadd.f32 %v21, %v105
    %107 = vdwg.mxu0
    %108 = vmatpush.msra.mxu0 0.0
    %109 = vmatpush.msra.mxu0 0.0
    %110 = vmatpush.msra.mxu0 0.0
    %111 = vmatpush.msra.mxu0 0.0
    %112 = vmatpush.msra.mxu0 0.0
    %113 = vmatpush.msra.mxu0 0.0
    %114 = vmatpush.msra.mxu0 0.0
    %115 = vmatpush.msra.mxu0 0.0
    %116 = vmatpush.msra.mxu0 0.0
    %117 = vmatpush.msra.mxu0 0.0
    %118 = vmatpush.msra.mxu0 0.0
    %119 = vmatpush.msra.mxu0 0.0
    %120 = vmatpush.msra.mxu0 0.0
    %121 = vmatpush.msra.mxu0 0.0
    %122 = vmatpush.msra.mxu0 0.0
    %123 = vmatpush.msra.mxu0 %v86
    %124 = vmatmul.f32.gmra.mxu0 %v29
    %v125 = vpop.f32.mrf.mxu0
    %v126 = vadd.f32 %v21, %v125
    %127 = vdwg.mxu0
    %s128 = scalar_lea.vmem [#allocation2], 16
    %129 = vst [vmem:[%s128] sm:$0xff] %v106
    %130 = vst [vmem:[%s128 + $0x8] sm:$0xff] %v126
    // Predicated region
    $region14: #{tpu_custom_call.1} parent=1 // pred_check
      _
    $region15: #{tpu_custom_call.1} parent=1 // pred_check_branch
      %132 = sbr.rel (0) target = $region17
    $region16: #{tpu_custom_call.1} parent=1 // pred_region
      %134 = vsyncadd [#allocation3], 0
      %s135 = sshll.u32 [#allocation2], 4
      %s136 = int_to_ptr.vmem [resolvable:$true] %s135
      %s137 = sshll.u32 %s3, 4
      %s138 = int_to_ptr.hbm [resolvable:$true] %s137
      %143 = dma.vmem_to_hbm [thread:$0]  %s136, 512, %s138, [#allocation3], 256, 256, 16
    $region17: #{tpu_custom_call.1} parent=1 // pred_fallthru
      _
    // Predicated region
    $region18: #{tpu_custom_call.1} parent=1 // pred_check
      _
    $region19: #{tpu_custom_call.1} parent=1 // pred_check_branch
      %145 = sbr.rel (0) target = $region21
    $region20: #{tpu_custom_call.1} parent=1 // pred_region
      %147 = dma.done [#allocation3], 512
    $region21: #{tpu_custom_call.1} parent=1 // pred_fallthru
      _
    %148 = vsyncpa [#allocation3], 1

</llo_original>
